<compile_context>
chip_gen: v6e
topology: v6e:2x2x1
jax: 0.10.0
libtpu: 0.0.40
codegen_flags: <defaults>
</compile_context>

<pallas_src>
import jax
import jax.numpy as jnp
from jax.experimental import pallas as pl
from jax.experimental.pallas import tpu as pltpu


def _pick_token_block(seq_len, target=256):
    """Largest divisor of seq_len that is <= target, preferring multiples of 8."""
    divisors = [d for d in range(1, min(seq_len, target) + 1) if seq_len % d == 0]
    mult8 = [d for d in divisors if d % 8 == 0]
    return max(mult8) if mult8 else max(divisors)


def _make_embeddings_kernel(ts, eps, add_pos):
    def kernel(ids_ref, tts_ref, word_hbm, ttab_hbm, *rest):
        if add_pos:
            pos_ref, gamma_ref, beta_ref, out_ref, wbuf, tbuf, sems = rest
        else:
            gamma_ref, beta_ref, out_ref, wbuf, tbuf, sems = rest
            pos_ref = None

        b = pl.program_id(0)
        sj = pl.program_id(1)
        s0 = sj * ts

        # Gather word / token-type rows for this token block: HBM -> VMEM row DMAs.
        @pl.loop(0, ts)
        def _issue(t):
            wid = ids_ref[b, s0 + t]
            tid = tts_ref[b, s0 + t]
            pltpu.make_async_copy(
                word_hbm.at[pl.ds(wid, 1)], wbuf.at[pl.ds(t, 1)], sems.at[0]
            ).start()
            pltpu.make_async_copy(
                ttab_hbm.at[pl.ds(tid, 1)], tbuf.at[pl.ds(t, 1)], sems.at[1]
            ).start()

        # Counted waits: each wait consumes exactly one row-copy's worth on the
        # shared semaphore, so after ts waits per stream all rows have landed.
        @pl.loop(0, ts)
        def _wait(t):
            pltpu.make_async_copy(
                word_hbm.at[pl.ds(0, 1)], wbuf.at[pl.ds(t, 1)], sems.at[0]
            ).wait()
            pltpu.make_async_copy(
                ttab_hbm.at[pl.ds(0, 1)], tbuf.at[pl.ds(t, 1)], sems.at[1]
            ).wait()

        x = wbuf[...].astype(jnp.float32) + tbuf[...].astype(jnp.float32)
        if add_pos:
            x = x + pos_ref[...].astype(jnp.float32)

        # BertLayerNorm (eps inside the sqrt), all math in f32.
        u = jnp.mean(x, axis=-1, keepdims=True)
        d = x - u
        var = jnp.mean(d * d, axis=-1, keepdims=True)
        inv = jax.lax.rsqrt(var + jnp.float32(eps))
        y = d * inv * gamma_ref[...].astype(jnp.float32) + beta_ref[...].astype(jnp.float32)

        out_ref[0] = y.astype(out_ref.dtype)

    return kernel


def bert_embeddings(
    input_ids,
    word_embeddings,
    token_type_embeddings,
    ln_weight,
    ln_bias,
    token_type_ids=None,
    position_embeddings=None,
    *,
    add_positional_encoding=True,
    layer_norm_eps=1e-12,
    token_block=256,
):
    """input_ids: (B, S) int; tables: (vocab, H), (type_vocab, H), optional (max_pos, H)."""
    B, S = input_ids.shape
    H = word_embeddings.shape[1]
    out_dtype = word_embeddings.dtype

    if token_type_ids is None:
        token_type_ids = jnp.zeros_like(input_ids)
    input_ids = input_ids.astype(jnp.int32)
    token_type_ids = token_type_ids.astype(jnp.int32)

    if add_positional_encoding:
        assert position_embeddings is not None, "position_embeddings required"
        assert position_embeddings.shape[0] >= S, "max_position_embeddings < seq_len"

    ts = _pick_token_block(S, target=token_block)
    grid = (B, S // ts)  # exact by construction: no tail dropped

    in_specs = [
        pl.BlockSpec(memory_space=pl.ANY),  # word embedding table (stays in HBM)
        pl.BlockSpec(memory_space=pl.ANY),  # token-type embedding table (stays in HBM)
    ]
    operands = [input_ids, token_type_ids, word_embeddings, token_type_embeddings]
    if add_positional_encoding:
        # Positions for a token block are contiguous rows -> normal pipelined BlockSpec.
        in_specs.append(pl.BlockSpec((ts, H), lambda b, sj, ids, tts: (sj, 0)))
        operands.append(position_embeddings)
    in_specs.append(pl.BlockSpec((1, H), lambda b, sj, ids, tts: (0, 0)))  # LN gamma
    in_specs.append(pl.BlockSpec((1, H), lambda b, sj, ids, tts: (0, 0)))  # LN beta
    operands.append(ln_weight.reshape(1, H))
    operands.append(ln_bias.reshape(1, H))

    kernel = _make_embeddings_kernel(ts, layer_norm_eps, add_positional_encoding)

    out = pl.pallas_call(
        kernel,
        out_shape=jax.ShapeDtypeStruct((B, S, H), out_dtype),
        grid_spec=pltpu.PrefetchScalarGridSpec(
            num_scalar_prefetch=2,
            grid=grid,
            in_specs=in_specs,
            out_specs=pl.BlockSpec((1, ts, H), lambda b, sj, ids, tts: (b, sj, 0)),
            scratch_shapes=[
                pltpu.VMEM((ts, H), word_embeddings.dtype),        # gathered word rows
                pltpu.VMEM((ts, H), token_type_embeddings.dtype),  # gathered token-type rows
                pltpu.SemaphoreType.DMA((2,)),                     # one sem per gather stream
            ],
        ),
        compiler_params=pltpu.CompilerParams(
            dimension_semantics=("parallel", "parallel"),
        ),
    )(*operands)
    return out


if __name__ == "__main__":
    # config: vocab_size=30, hidden_size=32, max_position_embeddings=64,
    #         type_vocab_size=2, layer_norm_eps=1e-12, add_positional_encoding_to_input=True
    batch, seq, hidden = 2, 8, 32
    vocab, max_pos, type_vocab = 30, 64, 2
    eps = 1e-12

    key = jax.random.PRNGKey(0)
    k_ids, k_tt, k_w, k_p, k_t, k_g, k_b = jax.random.split(key, 7)

    input_ids = jax.random.randint(k_ids, (batch, seq), 0, vocab, dtype=jnp.int32)
    token_type_ids = jax.random.randint(k_tt, (batch, seq), 0, type_vocab, dtype=jnp.int32)

    word_emb = jax.random.normal(k_w, (vocab, hidden), dtype=jnp.float32) * 0.02
    word_emb = word_emb.at[0].set(0.0)  # padding_idx=0 row is zero-initialized
    pos_emb = jax.random.normal(k_p, (max_pos, hidden), dtype=jnp.float32) * 0.02
    tt_emb = jax.random.normal(k_t, (type_vocab, hidden), dtype=jnp.float32) * 0.02
    ln_w = 1.0 + 0.1 * jax.random.normal(k_g, (hidden,), dtype=jnp.float32)
    ln_b = 0.1 * jax.random.normal(k_b, (hidden,), dtype=jnp.float32)

    def reference(ids, tts, add_pos):
        x = word_emb[ids] + tt_emb[tts]
        if add_pos:
            x = x + pos_emb[jnp.arange(seq)][None, :, :]
        u = x.mean(-1, keepdims=True)
        s = ((x - u) ** 2).mean(-1, keepdims=True)
        xn = (x - u) / jnp.sqrt(s + eps)
        return ln_w * xn + ln_b

    # Path 1: positional encoding on, explicit token_type_ids.
    out = bert_embeddings(
        input_ids, word_emb, tt_emb, ln_w, ln_b,
        token_type_ids=token_type_ids,
        position_embeddings=pos_emb,
        add_positional_encoding=True,
        layer_norm_eps=eps,
    )
    jax.block_until_ready(out)
    ref = reference(input_ids, token_type_ids, True)
    assert out.shape == (batch, seq, hidden)
    assert jnp.allclose(out, ref, atol=1e-4, rtol=1e-4), float(jnp.max(jnp.abs(out - ref)))

    # Path 2: positional encoding off, token_type_ids defaulted to zeros.
    out2 = bert_embeddings(
        input_ids, word_emb, tt_emb, ln_w, ln_b,
        token_type_ids=None,
        position_embeddings=None,
        add_positional_encoding=False,
        layer_norm_eps=eps,
    )
    jax.block_until_ready(out2)
    ref2 = reference(input_ids, jnp.zeros_like(input_ids), False)
    assert jnp.allclose(out2, ref2, atol=1e-4, rtol=1e-4), float(jnp.max(jnp.abs(out2 - ref2)))

    print("KERNEL_OK")
</pallas_src>

<mosaic_0001>
module attributes {stable_mosaic.version = 11 : i64} {
  func.func @kernel(%arg0: i32, %arg1: i32, %arg2: memref<2x8xi32, #tpu.memory_space<smem>>, %arg3: memref<2x8xi32, #tpu.memory_space<smem>>, %arg4: memref<30x32xf32, #tpu.memory_space<any>>, %arg5: memref<2x32xf32, #tpu.memory_space<any>>, %arg6: memref<8x32xf32, #tpu.memory_space<vmem>>, %arg7: memref<1x32xf32, #tpu.memory_space<vmem>>, %arg8: memref<1x32xf32, #tpu.memory_space<vmem>>, %arg9: memref<1x8x32xf32, #tpu.memory_space<vmem>>, %arg10: memref<8x32xf32, #tpu.memory_space<vmem>>, %arg11: memref<8x32xf32, #tpu.memory_space<vmem>>, %arg12: memref<2x!tpu.dma_semaphore, #tpu.memory_space<semaphore_mem>>) attributes {dimension_semantics = [#tpu.dimension_semantics<parallel>, #tpu.dimension_semantics<parallel>], iteration_bounds = array<i64: 2, 1>, scalar_prefetch = 2 : i64, scratch_operands = 3 : i64, tpu.core_type = #tpu.core_type<tc>, window_params = [{}, {}, {transform_indices = @transform_2, window_bounds = array<i64: 8, 32>}, {pipeline_mode = #tpu.pipeline_mode<synchronous>, transform_indices = @transform_3, window_bounds = array<i64: 1, 32>}, {pipeline_mode = #tpu.pipeline_mode<synchronous>, transform_indices = @transform_4, window_bounds = array<i64: 1, 32>}, {transform_indices = @transform_5, window_bounds = array<i64: 1, 8, 32>}]} {
    %c8_i32 = arith.constant 8 : i32
    %0 = arith.muli %arg1, %c8_i32 : i32
    %c0_i32 = arith.constant 0 : i32
    %c8_i32_0 = arith.constant 8 : i32
    %1 = arith.addi %c0_i32, %c8_i32_0 : i32
    %c1_i32 = arith.constant 1 : i32
    scf.for %arg13 = %c0_i32 to %1 step %c1_i32  : i32 {
      %c1_i32_22 = arith.constant 1 : i32
      %33 = arith.muli %arg13, %c1_i32_22 : i32
      %c0_i32_23 = arith.constant 0 : i32
      %34 = arith.addi %c0_i32_23, %33 : i32
      %35 = arith.addi %0, %34 : i32
      %36 = arith.index_cast %arg0 : i32 to index
      %37 = arith.index_cast %35 : i32 to index
      %38 = memref.load %arg2[%36, %37] : memref<2x8xi32, #tpu.memory_space<smem>>
      %39 = arith.addi %0, %34 : i32
      %40 = arith.index_cast %arg0 : i32 to index
      %41 = arith.index_cast %39 : i32 to index
      %42 = memref.load %arg3[%40, %41] : memref<2x8xi32, #tpu.memory_space<smem>>
      %c0_i32_24 = arith.constant 0 : i32
      %c0_i32_25 = arith.constant 0 : i32
      %43 = tpu.memref_slice %arg4[%38, %c0_i32_25] : memref<30x32xf32, #tpu.memory_space<any>> -> memref<1x32xf32, #tpu.memory_space<any>>
      %c0_i32_26 = arith.constant 0 : i32
      %44 = tpu.memref_slice %arg10[%34, %c0_i32_26] : memref<8x32xf32, #tpu.memory_space<vmem>> -> memref<1x32xf32, #tpu.memory_space<vmem>>
      %45 = tpu.memref_slice %arg12[%c0_i32_24] : memref<2x!tpu.dma_semaphore, #tpu.memory_space<semaphore_mem>> -> memref<1x!tpu.dma_semaphore, #tpu.memory_space<semaphore_mem>>
      %46 = tpu.memref_squeeze %45 : memref<1x!tpu.dma_semaphore, #tpu.memory_space<semaphore_mem>> -> memref<!tpu.dma_semaphore, #tpu.memory_space<semaphore_mem>>
      tpu.enqueue_dma source(%43 : memref<1x32xf32, #tpu.memory_space<any>>) target(%44 : memref<1x32xf32, #tpu.memory_space<vmem>>) target_semaphore(%46 : memref<!tpu.dma_semaphore, #tpu.memory_space<semaphore_mem>>)
      %c1_i32_27 = arith.constant 1 : i32
      %c0_i32_28 = arith.constant 0 : i32
      %47 = tpu.memref_slice %arg5[%42, %c0_i32_28] : memref<2x32xf32, #tpu.memory_space<any>> -> memref<1x32xf32, #tpu.memory_space<any>>
      %c0_i32_29 = arith.constant 0 : i32
      %48 = tpu.memref_slice %arg11[%34, %c0_i32_29] : memref<8x32xf32, #tpu.memory_space<vmem>> -> memref<1x32xf32, #tpu.memory_space<vmem>>
      %49 = tpu.memref_slice %arg12[%c1_i32_27] : memref<2x!tpu.dma_semaphore, #tpu.memory_space<semaphore_mem>> -> memref<1x!tpu.dma_semaphore, #tpu.memory_space<semaphore_mem>>
      %50 = tpu.memref_squeeze %49 : memref<1x!tpu.dma_semaphore, #tpu.memory_space<semaphore_mem>> -> memref<!tpu.dma_semaphore, #tpu.memory_space<semaphore_mem>>
      tpu.enqueue_dma source(%47 : memref<1x32xf32, #tpu.memory_space<any>>) target(%48 : memref<1x32xf32, #tpu.memory_space<vmem>>) target_semaphore(%50 : memref<!tpu.dma_semaphore, #tpu.memory_space<semaphore_mem>>)
    }
    %c8_i32_1 = arith.constant 8 : i32
    %c0_i32_2 = arith.constant 0 : i32
    %c8_i32_3 = arith.constant 8 : i32
    %2 = arith.addi %c0_i32_2, %c8_i32_3 : i32
    %c1_i32_4 = arith.constant 1 : i32
    scf.for %arg13 = %c0_i32_2 to %2 step %c1_i32_4  : i32 {
      %c1_i32_22 = arith.constant 1 : i32
      %33 = arith.muli %arg13, %c1_i32_22 : i32
      %c0_i32_23 = arith.constant 0 : i32
      %34 = arith.addi %c0_i32_23, %33 : i32
      %c0_i32_24 = arith.constant 0 : i32
      %c0_i32_25 = arith.constant 0 : i32
      %c0_i32_26 = arith.constant 0 : i32
      %35 = tpu.memref_slice %arg4[%c0_i32_25, %c0_i32_26] : memref<30x32xf32, #tpu.memory_space<any>> -> memref<1x32xf32, #tpu.memory_space<any>>
      %c0_i32_27 = arith.constant 0 : i32
      %36 = tpu.memref_slice %arg10[%34, %c0_i32_27] : memref<8x32xf32, #tpu.memory_space<vmem>> -> memref<1x32xf32, #tpu.memory_space<vmem>>
      %37 = tpu.memref_slice %arg12[%c0_i32_24] : memref<2x!tpu.dma_semaphore, #tpu.memory_space<semaphore_mem>> -> memref<1x!tpu.dma_semaphore, #tpu.memory_space<semaphore_mem>>
      %38 = tpu.memref_squeeze %37 : memref<1x!tpu.dma_semaphore, #tpu.memory_space<semaphore_mem>> -> memref<!tpu.dma_semaphore, #tpu.memory_space<semaphore_mem>>
      tpu.wait_dma2 semaphore(%38 : memref<!tpu.dma_semaphore, #tpu.memory_space<semaphore_mem>>) src(%35 : memref<1x32xf32, #tpu.memory_space<any>>) dst(%36 : memref<1x32xf32, #tpu.memory_space<vmem>>)
      %c1_i32_28 = arith.constant 1 : i32
      %c0_i32_29 = arith.constant 0 : i32
      %c0_i32_30 = arith.constant 0 : i32
      %39 = tpu.memref_slice %arg5[%c0_i32_29, %c0_i32_30] : memref<2x32xf32, #tpu.memory_space<any>> -> memref<1x32xf32, #tpu.memory_space<any>>
      %c0_i32_31 = arith.constant 0 : i32
      %40 = tpu.memref_slice %arg11[%34, %c0_i32_31] : memref<8x32xf32, #tpu.memory_space<vmem>> -> memref<1x32xf32, #tpu.memory_space<vmem>>
      %41 = tpu.memref_slice %arg12[%c1_i32_28] : memref<2x!tpu.dma_semaphore, #tpu.memory_space<semaphore_mem>> -> memref<1x!tpu.dma_semaphore, #tpu.memory_space<semaphore_mem>>
      %42 = tpu.memref_squeeze %41 : memref<1x!tpu.dma_semaphore, #tpu.memory_space<semaphore_mem>> -> memref<!tpu.dma_semaphore, #tpu.memory_space<semaphore_mem>>
      tpu.wait_dma2 semaphore(%42 : memref<!tpu.dma_semaphore, #tpu.memory_space<semaphore_mem>>) src(%39 : memref<1x32xf32, #tpu.memory_space<any>>) dst(%40 : memref<1x32xf32, #tpu.memory_space<vmem>>)
    }
    %c8_i32_5 = arith.constant 8 : i32
    %c0 = arith.constant 0 : index
    %c0_6 = arith.constant 0 : index
    %3 = vector.load %arg10[%c0, %c0_6] : memref<8x32xf32, #tpu.memory_space<vmem>>, vector<8x32xf32>
    %c0_7 = arith.constant 0 : index
    %c0_8 = arith.constant 0 : index
    %4 = vector.load %arg11[%c0_7, %c0_8] : memref<8x32xf32, #tpu.memory_space<vmem>>, vector<8x32xf32>
    %5 = arith.addf %3, %4 : vector<8x32xf32>
    %c0_9 = arith.constant 0 : index
    %c0_10 = arith.constant 0 : index
    %6 = vector.load %arg6[%c0_9, %c0_10] : memref<8x32xf32, #tpu.memory_space<vmem>>, vector<8x32xf32>
    %7 = arith.addf %5, %6 : vector<8x32xf32>
    %cst = arith.constant dense<0.000000e+00> : vector<8xf32>
    %8 = vector.multi_reduction <add>, %7, %cst [1] : vector<8x32xf32> to vector<8xf32>
    %9 = vector.shape_cast %8 : vector<8xf32> to vector<8x1xf32>
    %cst_11 = arith.constant 3.200000e+01 : f32
    %10 = vector.broadcast %cst_11 : f32 to vector<8x1xf32>
    %11 = arith.divf %9, %10 : vector<8x1xf32>
    %12 = vector.broadcast %11 : vector<8x1xf32> to vector<8x32xf32>
    %13 = arith.subf %7, %12 : vector<8x32xf32>
    %14 = arith.mulf %13, %13 : vector<8x32xf32>
    %cst_12 = arith.constant dense<0.000000e+00> : vector<8xf32>
    %15 = vector.multi_reduction <add>, %14, %cst_12 [1] : vector<8x32xf32> to vector<8xf32>
    %16 = vector.shape_cast %15 : vector<8xf32> to vector<8x1xf32>
    %cst_13 = arith.constant 3.200000e+01 : f32
    %17 = vector.broadcast %cst_13 : f32 to vector<8x1xf32>
    %18 = arith.divf %16, %17 : vector<8x1xf32>
    %cst_14 = arith.constant 9.99999996E-13 : f32
    %19 = vector.broadcast %cst_14 : f32 to vector<8x1xf32>
    %20 = arith.addf %18, %19 : vector<8x1xf32>
    %21 = math.rsqrt %20 : vector<8x1xf32>
    %22 = vector.broadcast %21 : vector<8x1xf32> to vector<8x32xf32>
    %23 = arith.mulf %13, %22 : vector<8x32xf32>
    %c0_15 = arith.constant 0 : index
    %c0_16 = arith.constant 0 : index
    %24 = vector.load %arg7[%c0_15, %c0_16] : memref<1x32xf32, #tpu.memory_space<vmem>>, vector<1x32xf32>
    %25 = vector.broadcast %24 : vector<1x32xf32> to vector<8x32xf32>
    %26 = arith.mulf %23, %25 : vector<8x32xf32>
    %c0_17 = arith.constant 0 : index
    %c0_18 = arith.constant 0 : index
    %27 = vector.load %arg8[%c0_17, %c0_18] : memref<1x32xf32, #tpu.memory_space<vmem>>, vector<1x32xf32>
    %28 = vector.broadcast %27 : vector<1x32xf32> to vector<8x32xf32>
    %29 = arith.addf %26, %28 : vector<8x32xf32>
    %c0_19 = arith.constant 0 : index
    %c0_20 = arith.constant 0 : index
    %c0_21 = arith.constant 0 : index
    %30 = vector.load %arg9[%c0_19, %c0_20, %c0_21] : memref<1x8x32xf32, #tpu.memory_space<vmem>>, vector<1x8x32xf32>
    %31 = vector.shape_cast %30 : vector<1x8x32xf32> to vector<8x32xf32>
    %32 = vector.shape_cast %29 : vector<8x32xf32> to vector<1x8x32xf32>
    tpu.vector_store %arg9[%c0_19, %c0_20, %c0_21], %32 {strides = array<i32>} : memref<1x8x32xf32, #tpu.memory_space<vmem>>, vector<1x8x32xf32>,
    return
  }
  func.func @transform_2(%arg0: i32, %arg1: i32, %arg2: memref<2x8xi32, #tpu.memory_space<smem>>, %arg3: memref<2x8xi32, #tpu.memory_space<smem>>) -> (i32, i32) {
    %c0_i32 = arith.constant 0 : i32
    %c0_i32_0 = arith.constant 0 : i32
    return %arg1, %c0_i32 : i32, i32
  }
  func.func @transform_3(%arg0: i32, %arg1: i32, %arg2: memref<2x8xi32, #tpu.memory_space<smem>>, %arg3: memref<2x8xi32, #tpu.memory_space<smem>>) -> (i32, i32) {
    %c0_i32 = arith.constant 0 : i32
    %c0_i32_0 = arith.constant 0 : i32
    %c0_i32_1 = arith.constant 0 : i32
    return %c0_i32, %c0_i32_0 : i32, i32
  }
  func.func @transform_4(%arg0: i32, %arg1: i32, %arg2: memref<2x8xi32, #tpu.memory_space<smem>>, %arg3: memref<2x8xi32, #tpu.memory_space<smem>>) -> (i32, i32) {
    %c0_i32 = arith.constant 0 : i32
    %c0_i32_0 = arith.constant 0 : i32
    %c0_i32_1 = arith.constant 0 : i32
    return %c0_i32, %c0_i32_0 : i32, i32
  }
  func.func @transform_5(%arg0: i32, %arg1: i32, %arg2: memref<2x8xi32, #tpu.memory_space<smem>>, %arg3: memref<2x8xi32, #tpu.memory_space<smem>>) -> (i32, i32, i32) {
    %c0_i32 = arith.constant 0 : i32
    %c0_i32_0 = arith.constant 0 : i32
    return %arg0, %arg1, %c0_i32 : i32, i32, i32
  }
}

</mosaic_0001>

<llo_original>
// kernel: tpu_custom_call.1
$region0: #{tpu_custom_call.1}
  #allocation0 [shape = 'u32[]', space=smem, size = 0x4, offset = 0x4, fixed_abs, tag = 'smem constant byte address 0x4 - core index']
  #allocation1 [shape = 'u32[144,128]{1,0:T(1,128)}', space=vmem, size = 0x12000, scoped, tag = 'internal scratch']
  #allocation2 [shape = 'f32[8,32]{1,0:T(8,128)}', space=vmem, size = 0x1000, scoped, tag = 'scratch operand']
  #allocation3 [shape = 'f32[8,32]{1,0:T(8,128)}', space=vmem, size = 0x1000, scoped, tag = 'scratch operand']
  #allocation4 [shape = 's32[2]{0}', space=sflag, size = 0x8, scoped, tag = 'scratch operand']
  #allocation5 [shape = 's32[1]{0}', space=sflag, size = 0x4, scoped, tag = 'scoped memory for tpu_custom_call.1']
  #allocation6 [shape = 'u8[1024]{0}', space=smem, size = 0x400, scoped, tag = 'prefetched SMEM operand 0']
  #allocation7 [shape = 'u8[1024]{0}', space=smem, size = 0x400, scoped, tag = 'prefetched SMEM operand 1']
  #allocation10 [shape = 's32[]', space=sflag, size = 0x4, offset = 0, fixed_abs, tag = 'sflag constant byte address 0x0 - dummy sync flag']
  #allocation11 [shape = 's32[]', space=sflag, size = 0x4, offset = 0, fixed_abs, tag = 'sflag constant byte address 0x0 - dummy sync flag']
  %s0 = inlined_call_operand.vmem [shape: s32[2,8], index: 0, kind: input, shape index: {}]
  %s1 = inlined_call_operand.vmem [shape: s32[2,8], index: 1, kind: input, shape index: {}]
  %s2 = inlined_call_operand.vmem [shape: f32[30,32], index: 2, kind: input, shape index: {}]
  %s3 = inlined_call_operand.vmem [shape: f32[2,32], index: 3, kind: input, shape index: {}]
  %s4 = inlined_call_operand.vmem [shape: f32[64,32], index: 4, kind: input, shape index: {}]
  %s5 = inlined_call_operand.vmem [shape: f32[1,32], index: 5, kind: input, shape index: {}]
  %s6 = inlined_call_operand.vmem [shape: f32[1,32], index: 6, kind: input, shape index: {}]
  %s7 = inlined_call_operand.hbm [shape: f32[2,8,32], index: 7, kind: output, shape index: {}]
  %s8 = sld [smem:[#allocation0]]
  $region119: #{tpu_custom_call.1} parent=0
    _
  %s10 = ssub.s32 1, %s8
  %s11 = scalar_select 0, %s10, %s8
  %s12 = sshll.u32 %s0, 4
  %s13 = int_to_ptr.vmem [resolvable:$true] %s12
  %15 = dma.vmem_to_smem %s13, 32, [#allocation6], [#allocation5]
  %s16 = sshll.u32 %s1, 4
  %s17 = int_to_ptr.vmem [resolvable:$true] %s16
  %19 = dma.vmem_to_smem %s17, 32, [#allocation7], [#allocation5]
  %20 = dma.done [#allocation5], 64
  %21 = sfence
  $region1: #{tpu_custom_call.1} parent=0
    #allocation8 [shape = 'u8[8192]{0}', space=vmem, size = 0x2000, scoped, tag = 'output window, operand 0']
    #allocation9 [shape = 's32[2]{0}', space=sflag, size = 0x8, scoped, tag = 'scoped memory for tpu_custom_call.1']
    %22 = vsyncpa [#allocation9], 0
    %s23 = scalar_lea.sflag [#allocation9], 1
    %24 = vsyncpa %s23, 0
    loop: start=0, step=1, limit=4
    $region2: #{tpu_custom_call.1} parent=1 // loop_pre_header
      _
    $region3: #{tpu_custom_call.1} parent=1 // loop_header
      %s26 = sphi 0, %s30
      %p27 = scmp.ge.s32.totalorder %s26, 4
      %s33 = sphi 0, %s45
      %s34 = sphi 0, %s41
      %s35 = sphi 0, %s33
      %s36 = sphi 0, %s34
      %s37 = sphi 0, %s35
      %s38 = sphi 0, %s36
      %s48 = sphi 0, %s50
      %s51 = sphi 0, %s48
      %s52 = sphi 0, %s51
      %s68 = sphi 0, %s52
      %s72 = sphi 0, %s72
      %s74 = sphi 0, %s72
      %s75 = sphi 0, %s74
      %s89 = sphi 0, %s75
      %s93 = sphi 0, %s93
      %s95 = sphi 0, %s93
      %s96 = sphi 0, %s95
      %s110 = sphi 0, %s96
      %s118 = sphi 0, %s120
      %s121 = sphi 0, %s118
      %s122 = sphi 0, %s121
      %s138 = sphi 0, %s122
    $region4: #{tpu_custom_call.1} parent=1 // loop_header_branch
      %29 = sbr.rel (%p27) target = $region8
    $region5: #{tpu_custom_call.1} parent=1 // loop_body
      %s31 = ssub.s32 %s26, 1
      %s32 = ssub.s32 %s26, 2
      %s39 = sadd.s32 1, %s34
      %p40 = scmp.ge.s32.totalorder %s39, 1
      %s41 = scalar_select %p40, 0, %s39
      %s42 = sadd.s32 1, %s33
      %s43 = scalar_select %p40, %s42, %s33
      %p44 = scmp.ge.s32.totalorder %s43, 2
      %s45 = scalar_select %p44, 0, %s43
      %s46 = ssub.s32 %s34, %s41
      %p47 = scmp.eq.s32.totalorder %s46, 0
      %s49 = sadd.s32 %s48, 1
      %s50 = scalar_select %p47, %s48, %s49
      %p53 = pneg %p47
      %p54 = scmp.eq.s32.totalorder %s26, 1
      %p55 = por %p53, %p54
      %p56 = scmp.ne.s32.totalorder %s48, %s51
      %p57 = scmp.eq.s32.totalorder %s26, 0
      %p58 = por %p56, %p57
      %p59 = scmp.ne.s32.totalorder %s48, %s51
      %p60 = scmp.eq.s32.totalorder %s31, 1
      %p61 = por %p59, %p60
      %p62 = scmp.ne.s32.totalorder %s51, %s52
      %p63 = scmp.eq.s32.totalorder %s31, 0
      %p64 = por %p62, %p63
      %p65 = scmp.ne.s32.totalorder %s51, %s52
      %p66 = scmp.eq.s32.totalorder %s32, 1
      %p67 = por %p65, %p66
      %p69 = scmp.ne.s32.totalorder %s52, %s68
      %p70 = scmp.eq.s32.totalorder %s32, 0
      %p71 = por %p69, %p70
      %s73 = sadd.s32 %s72, 1
      %p76 = scmp.eq.s32.totalorder %s26, 1
      %p77 = scmp.ne.s32.totalorder %s72, %s74
      %p78 = scmp.eq.s32.totalorder %s26, 0
      %p79 = por %p77, %p78
      %p80 = scmp.ne.s32.totalorder %s72, %s74
      %p81 = scmp.eq.s32.totalorder %s31, 1
      %p82 = por %p80, %p81
      %p83 = scmp.ne.s32.totalorder %s74, %s75
      %p84 = scmp.eq.s32.totalorder %s31, 0
      %p85 = por %p83, %p84
      %p86 = scmp.ne.s32.totalorder %s74, %s75
      %p87 = scmp.eq.s32.totalorder %s32, 1
      %p88 = por %p86, %p87
      %p90 = scmp.ne.s32.totalorder %s75, %s89
      %p91 = scmp.eq.s32.totalorder %s32, 0
      %p92 = por %p90, %p91
      %s94 = sadd.s32 %s93, 1
      %p97 = scmp.eq.s32.totalorder %s26, 1
      %p98 = scmp.ne.s32.totalorder %s93, %s95
      %p99 = scmp.eq.s32.totalorder %s26, 0
      %p100 = por %p98, %p99
      %p101 = scmp.ne.s32.totalorder %s93, %s95
      %p102 = scmp.eq.s32.totalorder %s31, 1
      %p103 = por %p101, %p102
      %p104 = scmp.ne.s32.totalorder %s95, %s96
      %p105 = scmp.eq.s32.totalorder %s31, 0
      %p106 = por %p104, %p105
      %p107 = scmp.ne.s32.totalorder %s95, %s96
      %p108 = scmp.eq.s32.totalorder %s32, 1
      %p109 = por %p107, %p108
      %p111 = scmp.ne.s32.totalorder %s96, %s110
      %p112 = scmp.eq.s32.totalorder %s32, 0
      %p113 = por %p111, %p112
      %s114 = ssub.s32 %s33, %s45
      %s115 = ssub.s32 %s34, %s41
      %s116 = sor.u32 %s114, %s115
      %p117 = scmp.eq.s32.totalorder %s116, 0
      %s119 = sadd.s32 %s118, 1
      %s120 = scalar_select %p117, %s118, %s119
      %p123 = pneg %p117
      %p124 = scmp.eq.s32.totalorder %s26, 1
      %p125 = por %p123, %p124
      %p126 = scmp.ne.s32.totalorder %s118, %s121
      %p127 = scmp.eq.s32.totalorder %s26, 0
      %p128 = por %p126, %p127
      %p129 = scmp.ne.s32.totalorder %s118, %s121
      %p130 = scmp.eq.s32.totalorder %s31, 1
      %p131 = por %p129, %p130
      %p132 = scmp.ne.s32.totalorder %s121, %s122
      %p133 = scmp.eq.s32.totalorder %s31, 0
      %p134 = por %p132, %p133
      %p135 = scmp.ne.s32.totalorder %s121, %s122
      %p136 = scmp.eq.s32.totalorder %s32, 1
      %p137 = por %p135, %p136
      %p139 = scmp.ne.s32.totalorder %s122, %s138
      %p140 = scmp.eq.s32.totalorder %s32, 0
      %p141 = por %p139, %p140
      %p142 = scmp.le.s32.totalorder 1, %s26
      %p143 = scmp.lt.s32.totalorder %s26, 3
      %p144 = pnand %p142, %p143
      %p145 = pneg %p144
      // Predicated region
      $region9: #{tpu_custom_call.1} parent=5 // pred_check
        _
      $region10: #{tpu_custom_call.1} parent=5 // pred_check_branch
        %147 = sbr.rel (%p144) target = $region12
      $region11: #{tpu_custom_call.1} parent=5 // pred_region
        %s148 = ssub.s32 %s26, 1
        // Predicated region
        $region13: #{tpu_custom_call.1} parent=11 // pred_check
          %p149 = pneg %p64
        $region14: #{tpu_custom_call.1} parent=11 // pred_check_branch
          %151 = sbr.rel (%p149) target = $region16
        $region15: #{tpu_custom_call.1} parent=11 // pred_region
          %p152 = scmp.lt.s32.totalorder %s36, 7
          %s153 = scalar_select %p152, %s36, 7
          %s154 = smul.addr %s153, 8
          %s155 = scalar_lea.vmem %s4, %s154
        $region16: #{tpu_custom_call.1} parent=11 // pred_fallthru
          _
        // Predicated region
        $region17: #{tpu_custom_call.1} parent=11 // pred_check
          %p156 = pneg %p85
        $region18: #{tpu_custom_call.1} parent=11 // pred_check_branch
          %158 = sbr.rel (%p156) target = $region20
        $region19: #{tpu_custom_call.1} parent=11 // pred_region
          _
        $region20: #{tpu_custom_call.1} parent=11 // pred_fallthru
          _
        // Predicated region
        $region21: #{tpu_custom_call.1} parent=11 // pred_check
          %p159 = pneg %p106
        $region22: #{tpu_custom_call.1} parent=11 // pred_check_branch
          %161 = sbr.rel (%p159) target = $region24
        $region23: #{tpu_custom_call.1} parent=11 // pred_region
          _
        $region24: #{tpu_custom_call.1} parent=11 // pred_fallthru
          _
      $region12: #{tpu_custom_call.1} parent=5 // pred_fallthru
        _
      %p162 = scmp.lt.s32.totalorder %s26, 2
      // Predicated region
      $region25: #{tpu_custom_call.1} parent=5 // pred_check
        %p163 = pneg %p162
      $region26: #{tpu_custom_call.1} parent=5 // pred_check_branch
        %165 = sbr.rel (%p163) target = $region28
      $region27: #{tpu_custom_call.1} parent=5 // pred_region
        _
      $region28: #{tpu_custom_call.1} parent=5 // pred_fallthru
        _
      %p166 = scmp.le.s32.totalorder 1, %s26
      %p167 = scmp.lt.s32.totalorder %s26, 3
      %p168 = pnand %p166, %p167
      %p169 = pneg %p168
      // Predicated region
      $region29: #{tpu_custom_call.1} parent=5 // pred_check
        _
      $region30: #{tpu_custom_call.1} parent=5 // pred_check_branch
        %171 = sbr.rel (%p168) target = $region32
      $region31: #{tpu_custom_call.1} parent=5 // pred_region
        %s172 = ssub.s32 %s26, 1
        %p173 = scmp.lt.s32.totalorder %s36, 7
        %s174 = scalar_select %p173, %s36, 7
        %s175 = smul.addr %s174, 8
        %s176 = scalar_lea.vmem %s4, %s175
        %p177 = pneg %p64
        %p178 = pneg %p61
        %p179 = pneg %p85
        %p180 = pneg %p82
        %p181 = pneg %p106
        %p182 = pneg %p103
        %p183 = pneg %p134
        %p184 = pneg %p131
        %s185 = sand.u32 %s121, 1
        %s186 = scalar_lea.sflag [#allocation9], %s185
        %s187 = sand.u32 %s121, 1
        %s188 = smul.addr %s187, 8
        %s189 = scalar_lea.vmem [#allocation8], %s188
        %p190 = scmp.lt.s32.totalorder %s36, 7
        %s191 = scalar_select %p190, %s36, 7
        %s192 = smul.addr %s191, 8
        %s193 = scalar_lea.vmem %s4, %s192
        %s194 = smul.u32 %s36, 8
        loop: start=0, step=1, limit=8
        $region33: #{tpu_custom_call.1} parent=31 // loop_pre_header
          _
        $region34: #{tpu_custom_call.1} parent=31 // loop_header
          %s196 = sphi 0, %s200
          %p197 = scmp.ge.s32.totalorder %s196, 8
        $region35: #{tpu_custom_call.1} parent=31 // loop_header_branch
          %199 = sbr.rel (%p197) target = $region39
        $region36: #{tpu_custom_call.1} parent=31 // loop_body
          %s201 = sadd.s32 %s194, %s196
          %s202 = sshra.s32 %s201, 7
          %s203 = sand.u32 %s201, 127
          %s204 = sadd.s32 %s202, %s35
          %s205 = smul.u32 %s204, 128
          %s206 = sshra.s32 %s201, 7
          %s207 = sand.u32 %s201, 127
          %s208 = sadd.s32 %s205, %s207
          %s209 = sld [smem:[#allocation6 + %s208]]
          %s210 = sld [smem:[#allocation7 + %s208]]
          %s211 = scalar_lea.vmem %s2, %s209
          %s212 = scalar_lea.vmem [#allocation2], %s196
          %p214 = scmp.lt.u32.totalorder 1, 8
          %p215 = pneg %p214
          // Predicated region
          $region40: #{tpu_custom_call.1} parent=36 // pred_check
            _
          $region41: #{tpu_custom_call.1} parent=36 // pred_check_branch
            %217 = sbr.rel (%p214) target = $region43
          $region42: #{tpu_custom_call.1} parent=36 // pred_region
            %s233 = sand.u32 1, 7
            %p234 = scmp.eq.s32.totalorder %s233, 0
            %p235 = pneg %p234
            // Predicated region
            $region55: #{tpu_custom_call.1} parent=42 // pred_check
              _
            $region56: #{tpu_custom_call.1} parent=42 // pred_check_branch
              %237 = sbr.rel (%p234) target = $region58
            $region57: #{tpu_custom_call.1} parent=42 // pred_region
              %s238 = sand.u32 1, 7
              %s239 = ssub.s32 1, %s238
              %s240 = scalar_lea.vmem %s211, %s239
              %s241 = ssub.s32 1, %s238
              %s242 = scalar_lea.vmem %s212, %s241 [#allocation2]
              %s243 = sshll.u32 1, %s238
              %s244 = ssub.s32 %s243, 1
              loop: start=0, step=1, limit=1
              $region59: #{tpu_custom_call.1} parent=57 // loop_pre_header
                _
              $region60: #{tpu_custom_call.1} parent=57 // loop_header
                %s246 = sphi 0, %s250
                %p247 = scmp.ge.s32.totalorder %s246, 1
                %s251 = sphi %s240, %s240
                %s252 = sphi %s242, %s242
              $region61: #{tpu_custom_call.1} parent=57 // loop_header_branch
                %249 = sbr.rel (%p247) target = $region65
              $region62: #{tpu_custom_call.1} parent=57 // loop_body
                %v253 = vld [vmem:[%s251] sm:%s244]
                %254 = vst [vmem:[%s252] sm:%s244] %v253
              $region63: #{tpu_custom_call.1} parent=57 // loop_footer
                %s250 = sadd.s32 1, %s246
              $region64: #{tpu_custom_call.1} parent=57 // loop_footer_branch
                %245 = sbr.rel target = $region60
              $region65: #{tpu_custom_call.1} parent=57 // loop_exit
                _
            $region58: #{tpu_custom_call.1} parent=42 // pred_fallthru
              _
          $region43: #{tpu_custom_call.1} parent=36 // pred_fallthru
            _
          // Predicated region
          $region44: #{tpu_custom_call.1} parent=36 // pred_check
            %p218 = pneg %p214
          $region45: #{tpu_custom_call.1} parent=36 // pred_check_branch
            %220 = sbr.rel (%p218) target = $region47
          $region46: #{tpu_custom_call.1} parent=36 // pred_region
            %s221 = sshll.u32 1, 1
            %s222 = ssub.s32 %s221, 1
            loop: start=0, step=1, limit=1
            $region48: #{tpu_custom_call.1} parent=46 // loop_pre_header
              _
            $region49: #{tpu_custom_call.1} parent=46 // loop_header
              %s224 = sphi 0, %s228
              %p225 = scmp.ge.s32.totalorder %s224, 1
              %s229 = sphi %s211, %s211
              %s230 = sphi %s212, %s212
            $region50: #{tpu_custom_call.1} parent=46 // loop_header_branch
              %227 = sbr.rel (%p225) target = $region54
            $region51: #{tpu_custom_call.1} parent=46 // loop_body
              %v231 = vld [vmem:[%s229] sm:%s222]
              %232 = vst [vmem:[%s230] sm:%s222] %v231
            $region52: #{tpu_custom_call.1} parent=46 // loop_footer
              %s228 = sadd.s32 1, %s224
            $region53: #{tpu_custom_call.1} parent=46 // loop_footer_branch
              %223 = sbr.rel target = $region49
            $region54: #{tpu_custom_call.1} parent=46 // loop_exit
              _
          $region47: #{tpu_custom_call.1} parent=36 // pred_fallthru
            _
          // Predicated region
          $region66: #{tpu_custom_call.1} parent=36 // pred_check
            _
          $region67: #{tpu_custom_call.1} parent=36 // pred_check_branch
            %257 = sbr.rel (0) target = $region69
          $region68: #{tpu_custom_call.1} parent=36 // pred_region
            %258 = vsyncadd [#allocation4], 16
          $region69: #{tpu_custom_call.1} parent=36 // pred_fallthru
            _
          %s259 = scalar_lea.vmem %s3, %s210
          %s260 = scalar_lea.vmem [#allocation3], %s196
          %s261 = scalar_lea.sflag [#allocation4], 1
          %p263 = scmp.lt.u32.totalorder 1, 8
          %p264 = pneg %p263
          // Predicated region
          $region70: #{tpu_custom_call.1} parent=36 // pred_check
            _
          $region71: #{tpu_custom_call.1} parent=36 // pred_check_branch
            %266 = sbr.rel (%p263) target = $region73
          $region72: #{tpu_custom_call.1} parent=36 // pred_region
            %s282 = sand.u32 1, 7
            %p283 = scmp.eq.s32.totalorder %s282, 0
            %p284 = pneg %p283
            // Predicated region
            $region85: #{tpu_custom_call.1} parent=72 // pred_check
              _
            $region86: #{tpu_custom_call.1} parent=72 // pred_check_branch
              %286 = sbr.rel (%p283) target = $region88
            $region87: #{tpu_custom_call.1} parent=72 // pred_region
              %s287 = sand.u32 1, 7
              %s288 = ssub.s32 1, %s287
              %s289 = scalar_lea.vmem %s259, %s288
              %s290 = ssub.s32 1, %s287
              %s291 = scalar_lea.vmem %s260, %s290 [#allocation3]
              %s292 = sshll.u32 1, %s287
              %s293 = ssub.s32 %s292, 1
              loop: start=0, step=1, limit=1
              $region89: #{tpu_custom_call.1} parent=87 // loop_pre_header
                _
              $region90: #{tpu_custom_call.1} parent=87 // loop_header
                %s295 = sphi 0, %s299
                %p296 = scmp.ge.s32.totalorder %s295, 1
                %s300 = sphi %s289, %s289
                %s301 = sphi %s291, %s291
              $region91: #{tpu_custom_call.1} parent=87 // loop_header_branch
                %298 = sbr.rel (%p296) target = $region95
              $region92: #{tpu_custom_call.1} parent=87 // loop_body
                %v302 = vld [vmem:[%s300] sm:%s293]
                %303 = vst [vmem:[%s301] sm:%s293] %v302
              $region93: #{tpu_custom_call.1} parent=87 // loop_footer
                %s299 = sadd.s32 1, %s295
              $region94: #{tpu_custom_call.1} parent=87 // loop_footer_branch
                %294 = sbr.rel target = $region90
              $region95: #{tpu_custom_call.1} parent=87 // loop_exit
                _
            $region88: #{tpu_custom_call.1} parent=72 // pred_fallthru
              _
          $region73: #{tpu_custom_call.1} parent=36 // pred_fallthru
            _
          // Predicated region
          $region74: #{tpu_custom_call.1} parent=36 // pred_check
            %p267 = pneg %p263
          $region75: #{tpu_custom_call.1} parent=36 // pred_check_branch
            %269 = sbr.rel (%p267) target = $region77
          $region76: #{tpu_custom_call.1} parent=36 // pred_region
            %s270 = sshll.u32 1, 1
            %s271 = ssub.s32 %s270, 1
            loop: start=0, step=1, limit=1
            $region78: #{tpu_custom_call.1} parent=76 // loop_pre_header
              _
            $region79: #{tpu_custom_call.1} parent=76 // loop_header
              %s273 = sphi 0, %s277
              %p274 = scmp.ge.s32.totalorder %s273, 1
              %s278 = sphi %s259, %s259
              %s279 = sphi %s260, %s260
            $region80: #{tpu_custom_call.1} parent=76 // loop_header_branch
              %276 = sbr.rel (%p274) target = $region84
            $region81: #{tpu_custom_call.1} parent=76 // loop_body
              %v280 = vld [vmem:[%s278] sm:%s271]
              %281 = vst [vmem:[%s279] sm:%s271] %v280
            $region82: #{tpu_custom_call.1} parent=76 // loop_footer
              %s277 = sadd.s32 1, %s273
            $region83: #{tpu_custom_call.1} parent=76 // loop_footer_branch
              %272 = sbr.rel target = $region79
            $region84: #{tpu_custom_call.1} parent=76 // loop_exit
              _
          $region77: #{tpu_custom_call.1} parent=36 // pred_fallthru
            _
          // Predicated region
          $region96: #{tpu_custom_call.1} parent=36 // pred_check
            _
          $region97: #{tpu_custom_call.1} parent=36 // pred_check_branch
            %306 = sbr.rel (0) target = $region99
          $region98: #{tpu_custom_call.1} parent=36 // pred_region
            %307 = vsyncadd %s261, 16
          $region99: #{tpu_custom_call.1} parent=36 // pred_fallthru
            _
        $region37: #{tpu_custom_call.1} parent=31 // loop_footer
          %s200 = sadd.s32 1, %s196
        $region38: #{tpu_custom_call.1} parent=31 // loop_footer_branch
          %195 = sbr.rel target = $region34
        $region39: #{tpu_custom_call.1} parent=31 // loop_exit
          _
        loop: start=0, step=1, limit=8
        $region100: #{tpu_custom_call.1} parent=31 // loop_pre_header
          _
        $region101: #{tpu_custom_call.1} parent=31 // loop_header
          %s309 = sphi 0, %s313
          %p310 = scmp.ge.s32.totalorder %s309, 8
        $region102: #{tpu_custom_call.1} parent=31 // loop_header_branch
          %312 = sbr.rel (%p310) target = $region106
        $region103: #{tpu_custom_call.1} parent=31 // loop_body
          %s314 = smul.u32 1, 1
          %s315 = sshll.u32 %s314, 4
          %316 = dma.done [#allocation4], %s315
          %s317 = scalar_lea.sflag [#allocation4], 1
          %s318 = sshll.u32 %s314, 4
          %319 = dma.done %s317, %s318
        $region104: #{tpu_custom_call.1} parent=31 // loop_footer
          %s313 = sadd.s32 1, %s309
        $region105: #{tpu_custom_call.1} parent=31 // loop_footer_branch
          %308 = sbr.rel target = $region101
        $region106: #{tpu_custom_call.1} parent=31 // loop_exit
          _
        %v320 = vld [vmem:[#allocation2] sm:$0xff]
        %v321 = vld [vmem:[#allocation3] sm:$0xff]
        %v322 = vadd.f32 %v320, %v321
        %v323 = vld [vmem:[%s193] sm:$0xff]
        %v324 = vadd.f32 %v322, %v323
        %vm325 = vcmask 261120
        %v326 = vsel %vm325, %v324, 0.0
        %327 = vadd.xlane.f32.xlu0 %v326
        %v328 = vpop.xlane.xlu0 %327
        %v329 = vrcp.pop 32.0
        %v330 = vmul.f32 %v328, %v329
        %v331 = vsub.f32 %v324, %v330
        %v332 = vmul.f32 %v331, %v331
        %v333 = vsel %vm325, %v332, 0.0
        %334 = vadd.xlane.f32.xlu0 %v333
        %v335 = vpop.xlane.xlu0 %334
        %v336 = vmul.f32 %v335, %v329
        %v337 = vadd.f32 %v336, 1e-12
        %v338 = vrsqrt.pop %v337
        %v339 = vmul.f32 %v331, %v338
        %v340 = vld [vmem:[%s5] sm:$0x1]
        %v342 = vlaneseq
        %v343 = vshrl.u32 %v342, 7
        %v344 = vsub.s32 0, %v343
        %v345 = vrot.slane %v340, %v344
        %v347 = vmul.f32 %v339, %v345
        %v348 = vld [vmem:[%s6] sm:$0x1]
        %v350 = vlaneseq
        %v351 = vshrl.u32 %v350, 7
        %v352 = vsub.s32 0, %v351
        %v353 = vrot.slane %v348, %v352
        %v355 = vadd.f32 %v347, %v353
        %356 = vst.msk [vmem:[%s189] sm:$0xff] %vm325, %v355
        %s357 = sand.u32 %s121, 1
        %s358 = scalar_lea.sflag [#allocation9], %s357
        %s359 = sand.u32 %s121, 1
        %s360 = smul.addr %s359, 8
        %s361 = scalar_lea.vmem [#allocation8], %s360
        // Predicated region
        $region107: #{tpu_custom_call.1} parent=31 // pred_check
          %p362 = pneg %p131
        $region108: #{tpu_custom_call.1} parent=31 // pred_check_branch
          %364 = sbr.rel (%p362) target = $region110
        $region109: #{tpu_custom_call.1} parent=31 // pred_region
          %s366 = ssub.s32 128, 128
          %367 = vsyncadd %s358, %s366
          %s368 = sadd.s32 %s36, %s35
          %s369 = smul.addr %s368, 128
          %s370 = scalar_lea.hbm %s7, %s369
          %s372 = sshll.u32 %s361, 4
          %s373 = int_to_ptr.vmem [resolvable:$true] %s372
          %375 = dma.vmem_to_hbm [thread:$0]  %s373, 128, %s370, %s358
        $region110: #{tpu_custom_call.1} parent=31 // pred_fallthru
          _
      $region32: #{tpu_custom_call.1} parent=5 // pred_fallthru
        _
      %p376 = scmp.le.s32.totalorder 2, %s26
      // Predicated region
      $region111: #{tpu_custom_call.1} parent=5 // pred_check
        %p377 = pneg %p376
      $region112: #{tpu_custom_call.1} parent=5 // pred_check_branch
        %379 = sbr.rel (%p377) target = $region114
      $region113: #{tpu_custom_call.1} parent=5 // pred_region
        %s380 = ssub.s32 %s26, 2
        // Predicated region
        $region115: #{tpu_custom_call.1} parent=113 // pred_check
          %p381 = pneg %p137
        $region116: #{tpu_custom_call.1} parent=113 // pred_check_branch
          %383 = sbr.rel (%p381) target = $region118
        $region117: #{tpu_custom_call.1} parent=113 // pred_region
          %s384 = sand.u32 %s122, 1
          %s385 = scalar_lea.sflag [#allocation9], %s384
          %s386 = sand.u32 %s122, 1
          %s387 = smul.addr %s386, 8
          %s388 = scalar_lea.vmem [#allocation8], %s387
          %389 = dma.done %s385, 128
        $region118: #{tpu_custom_call.1} parent=113 // pred_fallthru
          _
      $region114: #{tpu_custom_call.1} parent=5 // pred_fallthru
        _
    $region6: #{tpu_custom_call.1} parent=1 // loop_footer
      %s30 = sadd.s32 1, %s26
    $region7: #{tpu_custom_call.1} parent=1 // loop_footer_branch
      %25 = sbr.rel target = $region3
    $region8: #{tpu_custom_call.1} parent=1 // loop_exit
      _
    %390 = vsyncpa [#allocation9], 1
    %s391 = scalar_lea.sflag [#allocation9], 1
    %392 = vsyncpa %s391, 1
  %393 = vsyncmov [#allocation4]
  %s394 = vpop.sfrf %393
  %p395 = scmp.eq.s32.totalorder %s394, 0
  %p396 = pneg %p395
  %398 = shalt.err (%p396)
  %s399 = scalar_lea.sflag [#allocation4], 1
  %400 = vsyncmov %s399
  %s401 = vpop.sfrf %400
  %p402 = scmp.eq.s32.totalorder %s401, 0
  %p403 = pneg %p402
  %405 = shalt.err (%p403)

</llo_original>
